<compile_context>
chip_gen: v6e
topology: v6e:2x2x1
jax: 0.10.0
libtpu: 0.0.40
codegen_flags: <defaults>
</compile_context>

<pallas_src>
import functools
import math

import jax
import jax.numpy as jnp
from jax.experimental import pallas as pl
from jax.experimental.pallas import tpu as pltpu


def _cdiv(a, b):
    return -(-a // b)


def _round_up(a, b):
    return _cdiv(a, b) * b


_VMEM_LIMIT_BYTES = 32 * 1024 * 1024  # <= default scoped VMEM on v6e/v7x, raises v5e's 16 MiB


# ---------------------------------------------------------------------------
# reduction='mean' kernel
# ---------------------------------------------------------------------------
def _rmse_mean_kernel(pred_ref, ref_ref, out_ref, *, block_g, sub_g, g_total,
                      blocks_per_chunk, need_mask):
    c = pl.program_id(0)   # chunk axis ("parallel"; sharded across TCs on v7x)
    k = pl.program_id(1)   # streaming reduction axis ("arbitrary")

    @pl.when(k == 0)
    def _():
        out_ref[...] = jnp.zeros_like(out_ref)

    blk = c * blocks_per_chunk + k      # unclamped logical block index
    g0 = blk * block_g                  # first (8,128)-group of this block

    def accum(acc, start, size):
        # Per-sub-chunk loads keep d / d*d temporaries at <= 256 KiB instead
        # of full-block size (matters on v7x's 64 MiB VMEM).
        p = pred_ref[pl.ds(start, size), :, :].astype(jnp.float32)
        r = ref_ref[pl.ds(start, size), :, :].astype(jnp.float32)
        d = p - r
        if need_mask:
            # Mask BEFORE squaring so garbage (incl. NaN/Inf) in partial /
            # overflow blocks is zeroed out, never propagated.
            gidx = g0 + start + jax.lax.broadcasted_iota(jnp.int32, d.shape, 0)
            d = jnp.where(gidx < g_total, d, jnp.float32(0.0))
        # Reduction over the leading (untiled) axis: pure VPU adds; the single
        # cross-lane reduce happens once, in the wrapper.
        return acc + jnp.sum(d * d, axis=0)

    nsub = block_g // sub_g
    rem = block_g % sub_g
    acc = jnp.zeros((8, 128), jnp.float32)
    if nsub > 0:
        acc = jax.lax.fori_loop(
            0, nsub,
            lambda i, a: accum(a, pl.multiple_of(i * sub_g, sub_g), sub_g),
            acc, unroll=True)
    if rem > 0:
        acc = accum(acc, nsub * sub_g, rem)

    out_ref[...] += acc[None, :, :]


def _rmse_mean(pred, ref, *, target_block_bytes=2 * 1024 * 1024, sub_g=64):
    assert pred.shape == ref.shape
    n = pred.size
    flat_p = pred.reshape(-1)
    flat_r = ref.reshape(-1)

    group = 8 * 128
    g_total = n // group
    tail = n - g_total * group

    # Tail (< 1024 elems) handled with plain jnp — avoids a full-tensor
    # jnp.pad copy of both inputs just for the last partial vreg group.
    tail_sq = jnp.float32(0.0)
    if tail:
        tp = flat_p[g_total * group:].astype(jnp.float32)
        tr = flat_r[g_total * group:].astype(jnp.float32)
        tail_sq = jnp.sum((tp - tr) ** 2)

    if g_total == 0:
        return jnp.sqrt(tail_sq * (1.0 / n))

    if tail:
        p_body = flat_p[:g_total * group]
        r_body = flat_r[:g_total * group]
    else:
        p_body = flat_p
        r_body = flat_r
    p3 = p_body.reshape(g_total, 8, 128)
    r3 = r_body.reshape(g_total, 8, 128)

    # ~2 MiB per input block regardless of dtype (512 groups f32 / 1024 bf16).
    itemsize = jnp.dtype(pred.dtype).itemsize
    block_g_max = max(sub_g,
                      (target_block_bytes // (group * itemsize)) // sub_g * sub_g)
    block_g = min(block_g_max, g_total)
    total_blocks = _cdiv(g_total, block_g)

    # Two independent partial sums whenever there is >=2 blocks of work so the
    # "parallel" chunk axis can be split across both TensorCores on v7x (pure
    # sequential loop on single-TC v5e/v6e).  When total_blocks is odd, the
    # one overflow block is clamped to a valid block and fully masked.
    num_chunks = 2 if total_blocks >= 2 else 1
    blocks_per_chunk = _cdiv(total_blocks, num_chunks)
    need_mask = (num_chunks * blocks_per_chunk * block_g) != g_total

    if num_chunks * blocks_per_chunk > total_blocks:
        def in_map(c, k):
            return (jnp.minimum(c * blocks_per_chunk + k, total_blocks - 1), 0, 0)
    else:
        def in_map(c, k):
            return (c * blocks_per_chunk + k, 0, 0)

    partials = pl.pallas_call(
        functools.partial(_rmse_mean_kernel, block_g=block_g, sub_g=sub_g,
                          g_total=g_total, blocks_per_chunk=blocks_per_chunk,
                          need_mask=need_mask),
        out_shape=jax.ShapeDtypeStruct((num_chunks, 8, 128), jnp.float32),
        grid_spec=pltpu.PrefetchScalarGridSpec(
            num_scalar_prefetch=0,
            grid=(num_chunks, blocks_per_chunk),
            in_specs=[
                pl.BlockSpec((block_g, 8, 128), in_map),
                pl.BlockSpec((block_g, 8, 128), in_map),
            ],
            out_specs=pl.BlockSpec((1, 8, 128), lambda c, k: (c, 0, 0)),
        ),
        # "parallel" on the chunk axis is the portable megacore annotation;
        # pltpu.CORE_PARALLEL was considered but kept off to stay safe on
        # single-TC v5e/v6e.
        compiler_params=pltpu.CompilerParams(
            dimension_semantics=("parallel", "arbitrary"),
            vmem_limit_bytes=_VMEM_LIMIT_BYTES),
    )(p3, r3)

    # n is static at trace time: multiply by the constant 1/n, then sqrt.
    return jnp.sqrt((jnp.sum(partials) + tail_sq) * (1.0 / n))


# ---------------------------------------------------------------------------
# reduction='none' kernel: per (leading...) row, mean over H*W then sqrt.
# ---------------------------------------------------------------------------
def _rmse_none_kernel(pred_ref, ref_ref, out_ref, *, col_tile, hw, inv_hw,
                      need_mask):
    cj = pl.program_id(1)   # H*W reduction axis ("arbitrary")

    @pl.when(cj == 0)
    def _():
        out_ref[...] = jnp.zeros_like(out_ref)

    # Fold the block's columns 128 lanes at a time with lane-aligned VPU adds;
    # loading per-slice from the ref keeps temporaries one vreg column wide.
    acc = jnp.zeros(out_ref.shape, jnp.float32)
    for t in range(col_tile // 128):
        c0 = t * 128
        p = pred_ref[:, c0:c0 + 128].astype(jnp.float32)
        r = ref_ref[:, c0:c0 + 128].astype(jnp.float32)
        d = p - r
        if need_mask:
            col = (cj * col_tile + c0
                   + jax.lax.broadcasted_iota(jnp.int32, d.shape, 1))
            d = jnp.where(col < hw, d, jnp.float32(0.0))
        acc = acc + d * d
    out_ref[...] += acc

    @pl.when(cj == pl.num_programs(1) - 1)
    def _():
        s = jnp.sum(out_ref[...], axis=-1, keepdims=True)  # one XLU reduce / row tile
        out_ref[...] = jnp.broadcast_to(jnp.sqrt(s * inv_hw), out_ref.shape)


def _rmse_none(pred, ref, *, target_block_bytes=2 * 1024 * 1024,
               col_tile_max=4096, row_tile_max=512):
    assert pred.shape == ref.shape
    *lead, h, w = pred.shape
    hw = h * w
    rows = math.prod(lead) if lead else 1

    p2 = pred.reshape(rows, hw)   # no wrapper astype / no pad
    r2 = ref.reshape(rows, hw)

    itemsize = jnp.dtype(pred.dtype).itemsize
    col_tile = min(col_tile_max, _round_up(hw, 128))
    # Rows per block chosen so one input block is ~target_block_bytes.
    rows_budget = max(8, (target_block_bytes // (col_tile * itemsize)) // 8 * 8)
    tile_rows = min(row_tile_max, rows_budget, _round_up(rows, 8))
    grid_r = _cdiv(rows, tile_rows)
    # v7x: make sure there are >=2 row tiles when possible so the second
    # TensorCore gets work (harmless extra outer iteration on v5e/v6e).
    if grid_r == 1 and tile_rows >= 16:
        tile_rows = _round_up(_cdiv(rows, 2), 8)
        grid_r = _cdiv(rows, tile_rows)
    grid_c = _cdiv(hw, col_tile)
    rows_out = grid_r * tile_rows
    need_mask = (hw % col_tile) != 0

    out = pl.pallas_call(
        functools.partial(_rmse_none_kernel, col_tile=col_tile, hw=hw,
                          inv_hw=1.0 / hw, need_mask=need_mask),
        out_shape=jax.ShapeDtypeStruct((rows_out, 128), jnp.float32),
        grid_spec=pltpu.PrefetchScalarGridSpec(
            num_scalar_prefetch=0,
            grid=(grid_r, grid_c),
            in_specs=[
                pl.BlockSpec((tile_rows, col_tile), lambda ri, ci: (ri, ci)),
                pl.BlockSpec((tile_rows, col_tile), lambda ri, ci: (ri, ci)),
            ],
            out_specs=pl.BlockSpec((tile_rows, 128), lambda ri, ci: (ri, 0)),
        ),
        compiler_params=pltpu.CompilerParams(
            dimension_semantics=("parallel", "arbitrary"),
            vmem_limit_bytes=_VMEM_LIMIT_BYTES),
    )(p2, r2)
    # Keep the [:rows] slice: padded row blocks contain unspecified data.
    return out[:rows, 0].reshape(tuple(lead))


@functools.partial(jax.jit, static_argnames=("reduction",))
def rmse_loss(pred, ref, reduction: str = "mean"):
    """JAX/Pallas equivalent of torchsisr RMSELoss.forward."""
    # set_reduction() in the original module is pure config plumbing on the
    # wrapped nn.MSELoss; the effective behaviors are the two branches below.
    if reduction == "none":
        return _rmse_none(pred, ref)
    return _rmse_mean(pred, ref)


if __name__ == "__main__":
    key = jax.random.PRNGKey(0)
    k1, k2 = jax.random.split(key)
    # Small NCHW shapes consistent with the module's usage.
    pred = jax.random.normal(k1, (2, 4, 16, 16), dtype=jnp.float32)
    ref = jax.random.normal(k2, (2, 4, 16, 16), dtype=jnp.float32)

    # reduction='mean' (module default)
    out_mean = rmse_loss(pred, ref, reduction="mean")
    out_mean = jax.block_until_ready(out_mean)
    expected_mean = jnp.sqrt(jnp.mean((pred - ref) ** 2))
    assert jnp.allclose(out_mean, expected_mean, rtol=1e-5, atol=1e-6)

    # reduction='none' (sqrt of per-(B,C) MSE over spatial dims)
    out_none = rmse_loss(pred, ref, reduction="none")
    out_none = jax.block_until_ready(out_none)
    expected_none = jnp.sqrt(jnp.mean((pred - ref) ** 2, axis=(-1, -2)))
    assert out_none.shape == (2, 4)
    assert jnp.allclose(out_none, expected_none, rtol=1e-5, atol=1e-6)

    print("KERNEL_OK")
</pallas_src>

<mosaic_0001>
module attributes {stable_mosaic.version = 11 : i64} {
  func.func @_rmse_mean_kernel(%arg0: i32, %arg1: i32, %arg2: memref<2x8x128xf32, #tpu.memory_space<vmem>>, %arg3: memref<2x8x128xf32, #tpu.memory_space<vmem>>, %arg4: memref<1x8x128xf32, #tpu.memory_space<vmem>>) attributes {dimension_semantics = [#tpu.dimension_semantics<parallel>, #tpu.dimension_semantics<arbitrary>], iteration_bounds = array<i64: 1, 1>, scalar_prefetch = 0 : i64, scratch_operands = 0 : i64, tpu.core_type = #tpu.core_type<tc>, window_params = [{transform_indices = @transform_0, window_bounds = array<i64: 2, 8, 128>}, {transform_indices = @transform_1, window_bounds = array<i64: 2, 8, 128>}, {transform_indices = @transform_2, window_bounds = array<i64: 1, 8, 128>}]} {
    %c0_i32 = arith.constant 0 : i32
    %0 = arith.cmpi eq, %arg1, %c0_i32 : i32
    %1 = arith.extui %0 : i1 to i32
    %c0_i32_0 = arith.constant 0 : i32
    %2 = arith.cmpi ne, %1, %c0_i32_0 : i32
    scf.if %2 {
      %cst_13 = arith.constant 0.000000e+00 : f32
      %14 = vector.broadcast %cst_13 : f32 to vector<1x8x128xf32>
      %c0_14 = arith.constant 0 : index
      %c0_15 = arith.constant 0 : index
      %c0_16 = arith.constant 0 : index
      %15 = vector.load %arg4[%c0_14, %c0_15, %c0_16] : memref<1x8x128xf32, #tpu.memory_space<vmem>>, vector<1x8x128xf32>
      tpu.vector_store %arg4[%c0_14, %c0_15, %c0_16], %14 {strides = array<i32>} : memref<1x8x128xf32, #tpu.memory_space<vmem>>, vector<1x8x128xf32>,
    } else {
    }
    %cst = arith.constant 0.000000e+00 : f32
    %3 = vector.broadcast %cst : f32 to vector<8x128xf32>
    %c0 = arith.constant 0 : index
    %c0_1 = arith.constant 0 : index
    %c0_2 = arith.constant 0 : index
    %4 = vector.load %arg2[%c0, %c0_1, %c0_2] : memref<2x8x128xf32, #tpu.memory_space<vmem>>, vector<2x8x128xf32>
    %c0_3 = arith.constant 0 : index
    %c0_4 = arith.constant 0 : index
    %c0_5 = arith.constant 0 : index
    %5 = vector.load %arg3[%c0_3, %c0_4, %c0_5] : memref<2x8x128xf32, #tpu.memory_space<vmem>>, vector<2x8x128xf32>
    %6 = arith.subf %4, %5 : vector<2x8x128xf32>
    %7 = arith.mulf %6, %6 : vector<2x8x128xf32>
    %cst_6 = arith.constant dense<0.000000e+00> : vector<8x128xf32>
    %8 = vector.multi_reduction <add>, %7, %cst_6 [0] : vector<2x8x128xf32> to vector<8x128xf32>
    %9 = arith.addf %3, %8 : vector<8x128xf32>
    %c0_7 = arith.constant 0 : index
    %c0_8 = arith.constant 0 : index
    %c0_9 = arith.constant 0 : index
    %10 = vector.load %arg4[%c0_7, %c0_8, %c0_9] : memref<1x8x128xf32, #tpu.memory_space<vmem>>, vector<1x8x128xf32>
    %11 = vector.shape_cast %9 : vector<8x128xf32> to vector<1x8x128xf32>
    %12 = arith.addf %10, %11 : vector<1x8x128xf32>
    %c0_10 = arith.constant 0 : index
    %c0_11 = arith.constant 0 : index
    %c0_12 = arith.constant 0 : index
    %13 = vector.load %arg4[%c0_10, %c0_11, %c0_12] : memref<1x8x128xf32, #tpu.memory_space<vmem>>, vector<1x8x128xf32>
    tpu.vector_store %arg4[%c0_10, %c0_11, %c0_12], %12 {strides = array<i32>} : memref<1x8x128xf32, #tpu.memory_space<vmem>>, vector<1x8x128xf32>,
    return
  }
  func.func @transform_0(%arg0: i32, %arg1: i32) -> (i32, i32, i32) {
    %c1_i32 = arith.constant 1 : i32
    %0 = arith.muli %arg0, %c1_i32 : i32
    %1 = arith.addi %0, %arg1 : i32
    %c0_i32 = arith.constant 0 : i32
    %c0_i32_0 = arith.constant 0 : i32
    %c0_i32_1 = arith.constant 0 : i32
    return %1, %c0_i32, %c0_i32_0 : i32, i32, i32
  }
  func.func @transform_1(%arg0: i32, %arg1: i32) -> (i32, i32, i32) {
    %c1_i32 = arith.constant 1 : i32
    %0 = arith.muli %arg0, %c1_i32 : i32
    %1 = arith.addi %0, %arg1 : i32
    %c0_i32 = arith.constant 0 : i32
    %c0_i32_0 = arith.constant 0 : i32
    %c0_i32_1 = arith.constant 0 : i32
    return %1, %c0_i32, %c0_i32_0 : i32, i32, i32
  }
  func.func @transform_2(%arg0: i32, %arg1: i32) -> (i32, i32, i32) {
    %c0_i32 = arith.constant 0 : i32
    %c0_i32_0 = arith.constant 0 : i32
    %c0_i32_1 = arith.constant 0 : i32
    return %arg0, %c0_i32, %c0_i32_0 : i32, i32, i32
  }
}

</mosaic_0001>

<llo_original>
// kernel: rmse_loss.1
$region0: #{rmse_loss.1}
  #allocation0 [shape = 'u32[]', space=smem, size = 0x4, offset = 0x4, fixed_abs, tag = 'smem constant byte address 0x4 - core index']
  #allocation1 [shape = 'u32[144,128]{1,0:T(1,128)}', space=vmem, size = 0x12000, scoped, tag = 'internal scratch']
  %s0 = inlined_call_operand.vmem [shape: f32[2,8,128], index: 0, kind: input, shape index: {}]
  %s1 = inlined_call_operand.vmem [shape: f32[2,8,128], index: 1, kind: input, shape index: {}]
  %s2 = inlined_call_operand.vmem [shape: f32[1,8,128], index: 2, kind: output, shape index: {}]
  %s3 = sld [smem:[#allocation0]]
  $region22: #{rmse_loss.1} parent=0
    _
  %s5 = ssub.s32 1, %s3
  %s6 = scalar_select 0, %s5, %s3
  // Predicated region
  $region2: #{rmse_loss.1} parent=0 // pred_check
    _
  $region3: #{rmse_loss.1} parent=0 // pred_check_branch
    %8 = sbr.rel (0) target = $region5
  $region4: #{rmse_loss.1} parent=0 // pred_region
    %s9 = sadd.s32 0, 0
    %s10 = smul.u32 2, %s9
    %p11 = scmp.lt.s32.totalorder %s10, 1
    %s12 = scalar_select %p11, %s10, 1
    %s13 = smul.addr %s12, 8
    %s14 = scalar_lea.vmem %s0, %s13
    %s15 = sadd.s32 0, 0
    %s16 = smul.u32 2, %s15
  $region5: #{rmse_loss.1} parent=0 // pred_fallthru
    _
  // Predicated region
  $region6: #{rmse_loss.1} parent=0 // pred_check
    _
  $region7: #{rmse_loss.1} parent=0 // pred_check_branch
    %18 = sbr.rel (0) target = $region9
  $region8: #{rmse_loss.1} parent=0 // pred_region
    %s19 = sadd.s32 0, 0
    %s20 = smul.u32 2, %s19
    %p21 = scmp.lt.s32.totalorder %s20, 1
    %s22 = scalar_select %p21, %s20, 1
    %s23 = smul.addr %s22, 8
    %s24 = scalar_lea.vmem %s1, %s23
    %s25 = sadd.s32 0, 0
    %s26 = smul.u32 2, %s25
  $region9: #{rmse_loss.1} parent=0 // pred_fallthru
    _
  %s27 = sadd.s32 0, 0
  %s28 = smul.u32 2, %s27
  %p29 = scmp.lt.s32.totalorder %s28, 1
  %s30 = scalar_select %p29, %s28, 1
  %s31 = smul.addr %s30, 8
  %s32 = scalar_lea.vmem %s0, %s31
  %s33 = sadd.s32 0, 0
  %s34 = smul.u32 2, %s33
  %p35 = scmp.lt.s32.totalorder %s34, 1
  %s36 = scalar_select %p35, %s34, 1
  %s37 = smul.addr %s36, 8
  %s38 = scalar_lea.vmem %s1, %s37
  %s39 = sadd.s32 0, 0
  %s40 = smul.u32 2, %s39
  %p41 = scmp.lt.s32.totalorder %s40, 1
  %s42 = scalar_select %p41, %s40, 1
  %s43 = smul.addr %s42, 8
  %s44 = scalar_lea.vmem %s0, %s43
  %s45 = sadd.s32 0, 0
  %s46 = smul.u32 2, %s45
  %s47 = sadd.s32 0, 0
  %s48 = smul.u32 2, %s47
  %p49 = scmp.lt.s32.totalorder %s48, 1
  %s50 = scalar_select %p49, %s48, 1
  %s51 = smul.addr %s50, 8
  %s52 = scalar_lea.vmem %s1, %s51
  %s53 = sadd.s32 0, 0
  %s54 = smul.u32 2, %s53
  %p55 = scmp.eq.s32.totalorder 0, 0
  // Predicated region
  $region10: #{rmse_loss.1} parent=0 // pred_check
    %p56 = pneg %p55
  $region11: #{rmse_loss.1} parent=0 // pred_check_branch
    %58 = sbr.rel (%p56) target = $region13
  $region12: #{rmse_loss.1} parent=0 // pred_region
    %59 = vst [vmem:[%s2] sm:$0xff] 0.0
  $region13: #{rmse_loss.1} parent=0 // pred_fallthru
    _
  %v60 = vld [vmem:[%s44] sm:$0xff]
  %v61 = vld [vmem:[%s44 + $0x8] sm:$0xff]
  %v62 = vld [vmem:[%s52] sm:$0xff]
  %v63 = vld [vmem:[%s52 + $0x8] sm:$0xff]
  %v64 = vsub.f32 %v60, %v62
  %v65 = vsub.f32 %v61, %v63
  %v66 = vmul.f32 %v64, %v64
  %v67 = vmul.f32 %v65, %v65
  %v68 = vadd.f32 %v66, %v67
  %v69 = vadd.f32 %v68, 0.0
  %v70 = vld [vmem:[%s2] sm:$0xff]
  %v71 = vadd.f32 %v70, %v69
  %72 = vst [vmem:[%s2] sm:$0xff] %v71
  // Predicated region
  $region14: #{rmse_loss.1} parent=0 // pred_check
    _
  $region15: #{rmse_loss.1} parent=0 // pred_check_branch
    %74 = sbr.rel (0) target = $region17
  $region16: #{rmse_loss.1} parent=0 // pred_region
    _
  $region17: #{rmse_loss.1} parent=0 // pred_fallthru
    _
  // Predicated region
  $region18: #{rmse_loss.1} parent=0 // pred_check
    _
  $region19: #{rmse_loss.1} parent=0 // pred_check_branch
    %76 = sbr.rel (0) target = $region21
  $region20: #{rmse_loss.1} parent=0 // pred_region
    _
  $region21: #{rmse_loss.1} parent=0 // pred_fallthru
    _

</llo_original>
